<compile_context>
chip_gen: v6e
topology: v6e:2x2x1
jax: 0.10.0
libtpu: 0.0.40
codegen_flags: <defaults>
</compile_context>

<pallas_src>
import functools

import jax
import jax.numpy as jnp
from jax import lax
from jax.experimental import pallas as pl
from jax.experimental.pallas import tpu as pltpu


def _round_up(x, m):
    return (x + m - 1) // m * m


def _past_loss_kernel(x_ref, lut_ref, tgt_ref, out_ref, m_sc, l_sc, p_sc,
                      *, scalar, num_classes, batch, tile_b, tile_c):
    # x_ref:   (tile_b, F_pad) f32   lut_ref: (tile_c, F_pad) f32
    # tgt_ref: (tile_b, 1) int32     out_ref: (1, 1) f32 in SMEM
    # m_sc/l_sc/p_sc: (tile_b, 1) f32 VMEM scratch (running max / sum / target logit)
    i = pl.program_id(0)
    k = pl.program_id(1)

    @pl.when(k == 0)
    def _init():
        m_sc[...] = jnp.full_like(m_sc, -jnp.inf)
        l_sc[...] = jnp.zeros_like(l_sc)
        p_sc[...] = jnp.zeros_like(p_sc)

    # Fold the scale into the (tile_b, F) activations (B*F elements instead of
    # B*C) and feed the MXU bf16 tiles with an f32 accumulator.
    x = (x_ref[...] * scalar).astype(jnp.bfloat16)
    w = lut_ref[...].astype(jnp.bfloat16)
    logits = lax.dot_general(
        x, w,
        dimension_numbers=(((1,), (1,)), ((), ())),
        preferred_element_type=jnp.float32,
    )                                                           # (tile_b, tile_c)

    # Global class ids of this tile; padded classes -> -inf so they drop out
    # of the softmax.
    cls = k * tile_c + lax.broadcasted_iota(jnp.int32, (tile_b, tile_c), 1)
    logits = jnp.where(cls < num_classes, logits, -jnp.inf)

    # Accumulate the target-class logit (each row's target hits exactly one
    # C tile).  No float one-hot, no log_probs materialization.
    tgt = tgt_ref[...]                                          # (tile_b, 1)
    p_sc[...] += jnp.sum(jnp.where(cls == tgt, logits, 0.0),
                         axis=-1, keepdims=True)

    # Online (streaming) log-sum-exp over the class axis.  All f32.
    m_new = jnp.maximum(m_sc[...], jnp.max(logits, axis=-1, keepdims=True))
    alpha = jnp.exp(m_sc[...] - m_new)
    l_sc[...] = alpha * l_sc[...] + jnp.sum(jnp.exp(logits - m_new),
                                            axis=-1, keepdims=True)
    m_sc[...] = m_new

    @pl.when(k == pl.num_programs(1) - 1)
    def _finalize():
        # per-row CE loss: logsumexp(logits_r) - logits_r[target_r]
        per_row = m_sc[...] + jnp.log(l_sc[...]) - p_sc[...]    # (tile_b, 1)
        rows = i * tile_b + lax.broadcasted_iota(jnp.int32, (tile_b, 1), 0)
        per_row = jnp.where(rows < batch, per_row, 0.0)         # drop padded rows
        out_ref[0, 0] = jnp.sum(per_row)


def past_loss(inputs, lut, targets, scalar=20.0, *, tile_b=None, tile_c=None):
    """inputs: (B, F) f32, lut: (C, F) f32, targets: (B,) int -> scalar f32."""
    B, F = inputs.shape
    C, F2 = lut.shape
    assert F == F2, (inputs.shape, lut.shape)

    # Tile sizes: B tile multiple of 8 sublanes, C tile multiple of 128 lanes.
    # Capped so 2 * (tile_b*F_pad + tile_c*F_pad + tile_b*tile_c) * 4 B stays
    # well below the scoped-VMEM budget on every generation (incl. v7x 64 MiB
    # physical / 32 MiB default scoped).
    if tile_b is None:
        tile_b = min(_round_up(B, 8), 128)
    if tile_c is None:
        tile_c = min(_round_up(C, 128), 512)

    f_pad = _round_up(F, 128)
    b_pad = _round_up(B, tile_b)
    c_pad = _round_up(C, tile_c)

    x = jnp.zeros((b_pad, f_pad), jnp.float32).at[:B, :F].set(
        inputs.astype(jnp.float32))
    w = jnp.zeros((c_pad, f_pad), jnp.float32).at[:C, :F].set(
        lut.astype(jnp.float32))
    tgt = jnp.zeros((b_pad, 1), jnp.int32).at[:B, 0].set(
        targets.astype(jnp.int32))

    nb = b_pad // tile_b
    nc = c_pad // tile_c

    kernel = functools.partial(
        _past_loss_kernel,
        scalar=float(scalar), num_classes=C, batch=B,
        tile_b=tile_b, tile_c=tile_c)

    partials = pl.pallas_call(
        kernel,
        out_shape=jax.ShapeDtypeStruct((nb, 1), jnp.float32),
        grid_spec=pltpu.PrefetchScalarGridSpec(
            num_scalar_prefetch=0,
            grid=(nb, nc),
            in_specs=[
                pl.BlockSpec((tile_b, f_pad), lambda i, k: (i, 0)),
                pl.BlockSpec((tile_c, f_pad), lambda i, k: (k, 0)),
                # targets: constant over the C axis -> stays resident.
                pl.BlockSpec((tile_b, 1), lambda i, k: (i, 0)),
            ],
            out_specs=pl.BlockSpec((1, 1), lambda i, k: (i, 0),
                                   memory_space=pltpu.SMEM),
            scratch_shapes=[
                pltpu.VMEM((tile_b, 1), jnp.float32),   # running max m_i
                pltpu.VMEM((tile_b, 1), jnp.float32),   # running sum l_i
                pltpu.VMEM((tile_b, 1), jnp.float32),   # target-logit accumulator
            ],
        ),
        compiler_params=pltpu.CompilerParams(
            dimension_semantics=("parallel", "arbitrary"),
            vmem_limit_bytes=32 * 1024 * 1024,
        ),
        cost_estimate=pl.CostEstimate(
            flops=2 * B * C * F,
            transcendentals=B * C,
            bytes_accessed=4 * (B * F + C * F + B),
        ),
    )(x, w, tgt)

    # reduction='mean' over the real batch (tiny final reduction in the wrapper).
    return jnp.sum(partials) / jnp.float32(B)


# ------------------------- references for validation -------------------------

def past_loss_ref_f32(inputs, lut, targets, scalar=20.0):
    logits = (inputs @ lut.T) * scalar
    logp = jax.nn.log_softmax(logits, axis=-1)
    return -jnp.mean(jnp.take_along_axis(logp, targets[:, None], axis=-1))


def past_loss_ref_bf16(inputs, lut, targets, scalar=20.0):
    # Matches the kernel's MXU numerics: prescaled bf16 inputs, f32 accumulate.
    x = (inputs * scalar).astype(jnp.bfloat16)
    w = lut.astype(jnp.bfloat16)
    logits = jnp.dot(x, w.T, preferred_element_type=jnp.float32)
    logp = jax.nn.log_softmax(logits, axis=-1)
    return -jnp.mean(jnp.take_along_axis(logp, targets[:, None], axis=-1))


if __name__ == "__main__":
    key = jax.random.PRNGKey(0)
    B, num_features, num_classes = 8, 32, 16

    k1, k2, k3 = jax.random.split(key, 3)
    inputs = jax.random.normal(k1, (B, num_features), dtype=jnp.float32)
    # L2-normalize inputs (typical for OIM-style features).
    inputs = inputs / jnp.linalg.norm(inputs, axis=-1, keepdims=True)

    # Deterministically initialized lookup table (stands in for init_icc_feat),
    # row-normalized like the OIM buffer after updates.
    lut = jax.random.normal(k2, (num_classes, num_features), dtype=jnp.float32)
    lut = lut / jnp.linalg.norm(lut, axis=-1, keepdims=True)

    targets = jax.random.randint(k3, (B,), 0, num_classes, dtype=jnp.int32)

    loss = past_loss(inputs, lut, targets)
    loss = jax.block_until_ready(loss)

    # Tight check against a reference with matching (bf16-MXU) numerics.
    ref_bf16 = past_loss_ref_bf16(inputs, lut, targets)
    assert jnp.allclose(loss, ref_bf16, rtol=1e-4, atol=1e-4), (loss, ref_bf16)

    # Looser check against the full-f32 PyTorch-equivalent reference
    # (bf16 MXU inputs are a flagged numerics tradeoff).
    ref_f32 = past_loss_ref_f32(inputs, lut, targets)
    assert jnp.allclose(loss, ref_f32, rtol=3e-2, atol=3e-2), (loss, ref_f32)

    # TODO(synk): DCC.backward's in-place LUT momentum update is a training-time
    # side effect and is not part of the forward pass implemented here.
    print("KERNEL_OK")
</pallas_src>

<mosaic_0001>
module attributes {stable_mosaic.version = 11 : i64} {
  func.func @_past_loss_kernel(%arg0: i32, %arg1: i32, %arg2: memref<8x128xf32, #tpu.memory_space<vmem>>, %arg3: memref<128x128xf32, #tpu.memory_space<vmem>>, %arg4: memref<8x1xi32, #tpu.memory_space<vmem>>, %arg5: memref<1x1xf32, #tpu.memory_space<smem>>, %arg6: memref<8x1xf32, #tpu.memory_space<vmem>>, %arg7: memref<8x1xf32, #tpu.memory_space<vmem>>, %arg8: memref<8x1xf32, #tpu.memory_space<vmem>>) attributes {dimension_semantics = [#tpu.dimension_semantics<parallel>, #tpu.dimension_semantics<arbitrary>], iteration_bounds = array<i64: 1, 1>, scalar_prefetch = 0 : i64, scratch_operands = 3 : i64, tpu.core_type = #tpu.core_type<tc>, window_params = [{transform_indices = @transform_0, window_bounds = array<i64: 8, 128>}, {transform_indices = @transform_1, window_bounds = array<i64: 128, 128>}, {transform_indices = @transform_2, window_bounds = array<i64: 8, 1>}, {transform_indices = @transform_3, window_bounds = array<i64: 1, 1>}]} {
    %c0_i32 = arith.constant 0 : i32
    %0 = arith.cmpi eq, %arg1, %c0_i32 : i32
    %1 = arith.extui %0 : i1 to i32
    %c0_i32_0 = arith.constant 0 : i32
    %2 = arith.cmpi ne, %1, %c0_i32_0 : i32
    scf.if %2 {
      %cst_28 = arith.constant 0xFF800000 : f32
      %48 = vector.broadcast %cst_28 : f32 to vector<8x1xf32>
      %c0_29 = arith.constant 0 : index
      %c0_30 = arith.constant 0 : index
      %49 = vector.load %arg6[%c0_29, %c0_30] : memref<8x1xf32, #tpu.memory_space<vmem>>, vector<8x1xf32>
      tpu.vector_store %arg6[%c0_29, %c0_30], %48 {strides = array<i32>} : memref<8x1xf32, #tpu.memory_space<vmem>>, vector<8x1xf32>,
      %cst_31 = arith.constant 0.000000e+00 : f32
      %50 = vector.broadcast %cst_31 : f32 to vector<8x1xf32>
      %c0_32 = arith.constant 0 : index
      %c0_33 = arith.constant 0 : index
      %51 = vector.load %arg7[%c0_32, %c0_33] : memref<8x1xf32, #tpu.memory_space<vmem>>, vector<8x1xf32>
      tpu.vector_store %arg7[%c0_32, %c0_33], %50 {strides = array<i32>} : memref<8x1xf32, #tpu.memory_space<vmem>>, vector<8x1xf32>,
      %cst_34 = arith.constant 0.000000e+00 : f32
      %52 = vector.broadcast %cst_34 : f32 to vector<8x1xf32>
      %c0_35 = arith.constant 0 : index
      %c0_36 = arith.constant 0 : index
      %53 = vector.load %arg8[%c0_35, %c0_36] : memref<8x1xf32, #tpu.memory_space<vmem>>, vector<8x1xf32>
      tpu.vector_store %arg8[%c0_35, %c0_36], %52 {strides = array<i32>} : memref<8x1xf32, #tpu.memory_space<vmem>>, vector<8x1xf32>,
    } else {
    }
    %c0 = arith.constant 0 : index
    %c0_1 = arith.constant 0 : index
    %3 = vector.load %arg2[%c0, %c0_1] : memref<8x128xf32, #tpu.memory_space<vmem>>, vector<8x128xf32>
    %cst = arith.constant 2.000000e+01 : f32
    %4 = vector.broadcast %cst : f32 to vector<8x128xf32>
    %5 = arith.mulf %3, %4 : vector<8x128xf32>
    %6 = arith.truncf %5 : vector<8x128xf32> to vector<8x128xbf16>
    %c0_2 = arith.constant 0 : index
    %c0_3 = arith.constant 0 : index
    %7 = vector.load %arg3[%c0_2, %c0_3] : memref<128x128xf32, #tpu.memory_space<vmem>>, vector<128x128xf32>
    %8 = arith.truncf %7 : vector<128x128xf32> to vector<128x128xbf16>
    %cst_4 = arith.constant dense<0.000000e+00> : vector<8x128xf32>
    %9 = tpu.matmul %6, %8, %cst_4 {dimension_numbers = #tpu.dot_dimension_numbers<[1], [1], [0], [0], [0, 0, 1, 0], [], []>} : vector<8x128xbf16>, vector<128x128xbf16>, vector<8x128xf32> -> vector<8x128xf32>
    %c128_i32 = arith.constant 128 : i32
    %10 = arith.muli %arg1, %c128_i32 : i32
    %11 = tpu.iota {dimensions = array<i32: 1>} : vector<8x128xi32>
    %12 = vector.broadcast %10 : i32 to vector<8x128xi32>
    %13 = arith.addi %12, %11 : vector<8x128xi32>
    %c16_i32 = arith.constant 16 : i32
    %14 = vector.broadcast %c16_i32 : i32 to vector<8x128xi32>
    %15 = arith.cmpi slt, %13, %14 : vector<8x128xi32>
    %cst_5 = arith.constant 0xFF800000 : f32
    %16 = vector.broadcast %cst_5 : f32 to vector<8x128xf32>
    %17 = arith.select %15, %9, %16 : vector<8x128xi1>, vector<8x128xf32>
    %c0_6 = arith.constant 0 : index
    %c0_7 = arith.constant 0 : index
    %18 = vector.load %arg4[%c0_6, %c0_7] : memref<8x1xi32, #tpu.memory_space<vmem>>, vector<8x1xi32>
    %c0_8 = arith.constant 0 : index
    %c0_9 = arith.constant 0 : index
    %19 = vector.load %arg8[%c0_8, %c0_9] : memref<8x1xf32, #tpu.memory_space<vmem>>, vector<8x1xf32>
    %20 = vector.broadcast %18 : vector<8x1xi32> to vector<8x128xi32>
    %21 = arith.cmpi eq, %13, %20 : vector<8x128xi32>
    %cst_10 = arith.constant 0.000000e+00 : f32
    %22 = vector.broadcast %cst_10 : f32 to vector<8x128xf32>
    %23 = arith.select %21, %17, %22 : vector<8x128xi1>, vector<8x128xf32>
    %cst_11 = arith.constant dense<0.000000e+00> : vector<8xf32>
    %24 = vector.multi_reduction <add>, %23, %cst_11 [1] : vector<8x128xf32> to vector<8xf32>
    %25 = vector.shape_cast %24 : vector<8xf32> to vector<8x1xf32>
    %26 = arith.addf %19, %25 : vector<8x1xf32>
    %c0_12 = arith.constant 0 : index
    %c0_13 = arith.constant 0 : index
    %27 = vector.load %arg8[%c0_12, %c0_13] : memref<8x1xf32, #tpu.memory_space<vmem>>, vector<8x1xf32>
    tpu.vector_store %arg8[%c0_12, %c0_13], %26 {strides = array<i32>} : memref<8x1xf32, #tpu.memory_space<vmem>>, vector<8x1xf32>,
    %c0_14 = arith.constant 0 : index
    %c0_15 = arith.constant 0 : index
    %28 = vector.load %arg6[%c0_14, %c0_15] : memref<8x1xf32, #tpu.memory_space<vmem>>, vector<8x1xf32>
    %cst_16 = arith.constant dense<0xFF800000> : vector<8xf32>
    %29 = vector.multi_reduction <maximumf>, %17, %cst_16 [1] : vector<8x128xf32> to vector<8xf32>
    %30 = vector.shape_cast %29 : vector<8xf32> to vector<8x1xf32>
    %31 = arith.maximumf %28, %30 : vector<8x1xf32>
    %c0_17 = arith.constant 0 : index
    %c0_18 = arith.constant 0 : index
    %32 = vector.load %arg6[%c0_17, %c0_18] : memref<8x1xf32, #tpu.memory_space<vmem>>, vector<8x1xf32>
    %33 = arith.subf %32, %31 : vector<8x1xf32>
    %34 = math.exp %33 : vector<8x1xf32>
    %c0_19 = arith.constant 0 : index
    %c0_20 = arith.constant 0 : index
    %35 = vector.load %arg7[%c0_19, %c0_20] : memref<8x1xf32, #tpu.memory_space<vmem>>, vector<8x1xf32>
    %36 = arith.mulf %34, %35 : vector<8x1xf32>
    %37 = vector.broadcast %31 : vector<8x1xf32> to vector<8x128xf32>
    %38 = arith.subf %17, %37 : vector<8x128xf32>
    %39 = math.exp %38 : vector<8x128xf32>
    %cst_21 = arith.constant dense<0.000000e+00> : vector<8xf32>
    %40 = vector.multi_reduction <add>, %39, %cst_21 [1] : vector<8x128xf32> to vector<8xf32>
    %41 = vector.shape_cast %40 : vector<8xf32> to vector<8x1xf32>
    %42 = arith.addf %36, %41 : vector<8x1xf32>
    %c0_22 = arith.constant 0 : index
    %c0_23 = arith.constant 0 : index
    %43 = vector.load %arg7[%c0_22, %c0_23] : memref<8x1xf32, #tpu.memory_space<vmem>>, vector<8x1xf32>
    tpu.vector_store %arg7[%c0_22, %c0_23], %42 {strides = array<i32>} : memref<8x1xf32, #tpu.memory_space<vmem>>, vector<8x1xf32>,
    %c0_24 = arith.constant 0 : index
    %c0_25 = arith.constant 0 : index
    %44 = vector.load %arg6[%c0_24, %c0_25] : memref<8x1xf32, #tpu.memory_space<vmem>>, vector<8x1xf32>
    tpu.vector_store %arg6[%c0_24, %c0_25], %31 {strides = array<i32>} : memref<8x1xf32, #tpu.memory_space<vmem>>, vector<8x1xf32>,
    %c0_i32_26 = arith.constant 0 : i32
    %45 = arith.cmpi eq, %arg1, %c0_i32_26 : i32
    %46 = arith.extui %45 : i1 to i32
    %c0_i32_27 = arith.constant 0 : i32
    %47 = arith.cmpi ne, %46, %c0_i32_27 : i32
    scf.if %47 {
      %c0_28 = arith.constant 0 : index
      %c0_29 = arith.constant 0 : index
      %48 = vector.load %arg6[%c0_28, %c0_29] : memref<8x1xf32, #tpu.memory_space<vmem>>, vector<8x1xf32>
      %c0_30 = arith.constant 0 : index
      %c0_31 = arith.constant 0 : index
      %49 = vector.load %arg7[%c0_30, %c0_31] : memref<8x1xf32, #tpu.memory_space<vmem>>, vector<8x1xf32>
      %50 = math.log %49 : vector<8x1xf32>
      %51 = arith.addf %48, %50 : vector<8x1xf32>
      %c0_32 = arith.constant 0 : index
      %c0_33 = arith.constant 0 : index
      %52 = vector.load %arg8[%c0_32, %c0_33] : memref<8x1xf32, #tpu.memory_space<vmem>>, vector<8x1xf32>
      %53 = arith.subf %51, %52 : vector<8x1xf32>
      %c8_i32 = arith.constant 8 : i32
      %54 = arith.muli %arg0, %c8_i32 : i32
      %55 = tpu.iota {dimensions = array<i32: 0>} : vector<8x1xi32>
      %56 = vector.broadcast %54 : i32 to vector<8x1xi32>
      %57 = arith.addi %56, %55 : vector<8x1xi32>
      %c8_i32_34 = arith.constant 8 : i32
      %58 = vector.broadcast %c8_i32_34 : i32 to vector<8x1xi32>
      %59 = arith.cmpi slt, %57, %58 : vector<8x1xi32>
      %cst_35 = arith.constant 0.000000e+00 : f32
      %60 = vector.broadcast %cst_35 : f32 to vector<8x1xf32>
      %61 = arith.select %59, %53, %60 : vector<8x1xi1>, vector<8x1xf32>
      %62 = vector.shape_cast %61 : vector<8x1xf32> to vector<1x8x1xf32>
      %cst_36 = arith.constant dense<0.000000e+00> : vector<1xf32>
      %63 = vector.multi_reduction <add>, %62, %cst_36 [1, 2] : vector<1x8x1xf32> to vector<1xf32>
      %64 = vector.shape_cast %63 : vector<1xf32> to vector<1x1x1xf32>
      %65 = vector.extract %64[0, 0, 0] : f32 from vector<1x1x1xf32>
      %c0_37 = arith.constant 0 : index
      %c0_38 = arith.constant 0 : index
      %66 = memref.load %arg5[%c0_37, %c0_38] : memref<1x1xf32, #tpu.memory_space<smem>>
      memref.store %65, %arg5[%c0_37, %c0_38] : memref<1x1xf32, #tpu.memory_space<smem>>
    } else {
    }
    return
  }
  func.func @transform_0(%arg0: i32, %arg1: i32) -> (i32, i32) {
    %c0_i32 = arith.constant 0 : i32
    %c0_i32_0 = arith.constant 0 : i32
    return %arg0, %c0_i32 : i32, i32
  }
  func.func @transform_1(%arg0: i32, %arg1: i32) -> (i32, i32) {
    %c0_i32 = arith.constant 0 : i32
    %c0_i32_0 = arith.constant 0 : i32
    return %arg1, %c0_i32 : i32, i32
  }
  func.func @transform_2(%arg0: i32, %arg1: i32) -> (i32, i32) {
    %c0_i32 = arith.constant 0 : i32
    %c0_i32_0 = arith.constant 0 : i32
    return %arg0, %c0_i32 : i32, i32
  }
  func.func @transform_3(%arg0: i32, %arg1: i32) -> (i32, i32) {
    %c0_i32 = arith.constant 0 : i32
    %c0_i32_0 = arith.constant 0 : i32
    return %arg0, %c0_i32 : i32, i32
  }
}

</mosaic_0001>

<llo_original>
// kernel: tpu_custom_call.1
$region0: #{tpu_custom_call.1}
  #allocation0 [shape = 'u32[]', space=smem, size = 0x4, offset = 0x4, fixed_abs, tag = 'smem constant byte address 0x4 - core index']
  #allocation1 [shape = 'u32[144,128]{1,0:T(1,128)}', space=vmem, size = 0x12000, scoped, tag = 'internal scratch']
  #allocation2 [shape = 'f32[8,1]{1,0:T(8,128)}', space=vmem, size = 0x1000, scoped, tag = 'scratch operand']
  #allocation3 [shape = 'f32[8,1]{1,0:T(8,128)}', space=vmem, size = 0x1000, scoped, tag = 'scratch operand']
  #allocation4 [shape = 'f32[8,1]{1,0:T(8,128)}', space=vmem, size = 0x1000, scoped, tag = 'scratch operand']
  %s0 = inlined_call_operand.vmem [shape: f32[8,128], index: 0, kind: input, shape index: {}]
  %s1 = inlined_call_operand.hbm [shape: f32[128,128], index: 1, kind: input, shape index: {}]
  %s2 = inlined_call_operand.vmem [shape: s32[8,1], index: 2, kind: input, shape index: {}]
  %s3 = inlined_call_operand.hbm [shape: f32[1,1], index: 3, kind: output, shape index: {}]
  %s4 = sld [smem:[#allocation0]]
  $region34: #{tpu_custom_call.1} parent=0
    _
  %s6 = ssub.s32 1, %s4
  %s7 = scalar_select 0, %s6, %s4
  $region1: #{tpu_custom_call.1} parent=0
    #allocation5 [shape = 'u8[65536]{0}', space=vmem, size = 0x10000, scoped, tag = 'input window, operand 1, single buffered']
    #allocation6 [shape = 's32[1]{0}', space=sflag, size = 0x4, scoped, tag = 'scoped memory for tpu_custom_call.1']
    #allocation7 [shape = 's32[1]{0}', space=sflag, size = 0x4, scoped, tag = 'scoped memory for tpu_custom_call.1']
    #allocation8 [shape = 'u8[512]{0}', space=smem, size = 0x200, scoped, tag = 'output window, operand 0, single buffered']
    %8 = vsyncpa [#allocation6], 0
    %9 = vsyncpa [#allocation7], 0
    // Predicated region
    $region2: #{tpu_custom_call.1} parent=1 // pred_check
      _
    $region3: #{tpu_custom_call.1} parent=1 // pred_check_branch
      %11 = sbr.rel (0) target = $region5
    $region4: #{tpu_custom_call.1} parent=1 // pred_region
      _
    $region5: #{tpu_custom_call.1} parent=1 // pred_fallthru
      _
    // Predicated region
    $region6: #{tpu_custom_call.1} parent=1 // pred_check
      _
    $region7: #{tpu_custom_call.1} parent=1 // pred_check_branch
      %13 = sbr.rel (0) target = $region9
    $region8: #{tpu_custom_call.1} parent=1 // pred_region
      %s15 = ssub.s32 2048, 2048
      %16 = vsyncadd [#allocation6], %s15
      %s17 = sshll.u32 [#allocation5], 4
      %s18 = int_to_ptr.vmem [resolvable:$true] %s17
      %23 = dma.hbm_to_vmem [thread:$0]  %s1, 2048, %s18, [#allocation6], 128, 128, 8
    $region9: #{tpu_custom_call.1} parent=1 // pred_fallthru
      _
    // Predicated region
    $region10: #{tpu_custom_call.1} parent=1 // pred_check
      _
    $region11: #{tpu_custom_call.1} parent=1 // pred_check_branch
      %25 = sbr.rel (0) target = $region13
    $region12: #{tpu_custom_call.1} parent=1 // pred_region
      _
    $region13: #{tpu_custom_call.1} parent=1 // pred_fallthru
      _
    // Predicated region
    $region14: #{tpu_custom_call.1} parent=1 // pred_check
      _
    $region15: #{tpu_custom_call.1} parent=1 // pred_check_branch
      %27 = sbr.rel (0) target = $region17
    $region16: #{tpu_custom_call.1} parent=1 // pred_region
      %28 = dma.done [#allocation6], 2048
    $region17: #{tpu_custom_call.1} parent=1 // pred_fallthru
      _
    %p30 = scmp.eq.s32.totalorder 0, 0
    // Predicated region
    $region18: #{tpu_custom_call.1} parent=1 // pred_check
      %p31 = pneg %p30
    $region19: #{tpu_custom_call.1} parent=1 // pred_check_branch
      %33 = sbr.rel (%p31) target = $region21
    $region20: #{tpu_custom_call.1} parent=1 // pred_region
      %vm34 = vcmask 7168
      %35 = vst.msk [vmem:[#allocation2] sm:$0xff] %vm34, -inf
      %36 = vst.msk [vmem:[#allocation3] sm:$0xff] %vm34, 0.0
      %37 = vst.msk [vmem:[#allocation4] sm:$0xff] %vm34, 0.0
    $region21: #{tpu_custom_call.1} parent=1 // pred_fallthru
      _
    %v38 = vld [vmem:[%s0] sm:$0xff]
    %v39 = vmul.f32 %v38, 20.0
    %v40 = vpack.c.bf16 %v39, %v39
    %v41 = vld [vmem:[#allocation5] sm:$0xff]
    %v42 = vld [vmem:[#allocation5 + $0x8] sm:$0xff]
    %v43 = vld [vmem:[#allocation5 + $0x10] sm:$0xff]
    %v44 = vld [vmem:[#allocation5 + $0x18] sm:$0xff]
    %v45 = vld [vmem:[#allocation5 + $0x20] sm:$0xff]
    %v46 = vld [vmem:[#allocation5 + $0x28] sm:$0xff]
    %v47 = vld [vmem:[#allocation5 + $0x30] sm:$0xff]
    %v48 = vld [vmem:[#allocation5 + $0x38] sm:$0xff]
    %v49 = vld [vmem:[#allocation5 + $0x40] sm:$0xff]
    %v50 = vld [vmem:[#allocation5 + $0x48] sm:$0xff]
    %v51 = vld [vmem:[#allocation5 + $0x50] sm:$0xff]
    %v52 = vld [vmem:[#allocation5 + $0x58] sm:$0xff]
    %v53 = vld [vmem:[#allocation5 + $0x60] sm:$0xff]
    %v54 = vld [vmem:[#allocation5 + $0x68] sm:$0xff]
    %v55 = vld [vmem:[#allocation5 + $0x70] sm:$0xff]
    %v56 = vld [vmem:[#allocation5 + $0x78] sm:$0xff]
    %v57 = vpack.c.bf16 %v42, %v41
    %v58 = vpack.c.bf16 %v44, %v43
    %v59 = vpack.c.bf16 %v46, %v45
    %v60 = vpack.c.bf16 %v48, %v47
    %v61 = vpack.c.bf16 %v50, %v49
    %v62 = vpack.c.bf16 %v52, %v51
    %v63 = vpack.c.bf16 %v54, %v53
    %v64 = vpack.c.bf16 %v56, %v55
    %65 = vmatprep.subr.bf16.mxu0 0
    %66 = vmatpush1.bf16.xpose.msra.mxu0 %v64
    %67 = vmatprep.subr.bf16.mxu0 0
    %68 = vmatpush1.bf16.xpose.msra.mxu0 %v63
    %69 = vmatprep.subr.bf16.mxu0 0
    %70 = vmatpush1.bf16.xpose.msra.mxu0 %v62
    %71 = vmatprep.subr.bf16.mxu0 0
    %72 = vmatpush1.bf16.xpose.msra.mxu0 %v61
    %73 = vmatprep.subr.bf16.mxu0 0
    %74 = vmatpush1.bf16.xpose.msra.mxu0 %v60
    %75 = vmatprep.subr.bf16.mxu0 0
    %76 = vmatpush1.bf16.xpose.msra.mxu0 %v59
    %77 = vmatprep.subr.bf16.mxu0 0
    %78 = vmatpush1.bf16.xpose.msra.mxu0 %v58
    %79 = vmatprep.subr.bf16.mxu0 0
    %80 = vmatpush1.bf16.xpose.msra.mxu0 %v57
    %81 = vmatprep.subr.bf16.mxu0 0
    %82 = vmatpush2.bf16.xpose.msra.mxu0 0
    %83 = vmatprep.subr.bf16.mxu0 0
    %84 = vmatpush2.bf16.xpose.msra.mxu0 0
    %85 = vmatprep.subr.bf16.mxu0 0
    %86 = vmatpush2.bf16.xpose.msra.mxu0 0
    %87 = vmatprep.subr.bf16.mxu0 0
    %88 = vmatpush2.bf16.xpose.msra.mxu0 0
    %89 = vmatprep.subr.bf16.mxu0 0
    %90 = vmatpush2.bf16.xpose.msra.mxu0 0
    %91 = vmatprep.subr.bf16.mxu0 0
    %92 = vmatpush2.bf16.xpose.msra.mxu0 0
    %93 = vmatprep.subr.bf16.mxu0 0
    %94 = vmatpush2.bf16.xpose.msra.mxu0 0
    %95 = vmatprep.subr.bf16.mxu0 0
    %96 = vmatpush2.bf16.xpose.msra.mxu0 0
    %97 = vmatprep.mubr.bf16.mxu0 0
    %98 = vmatmul.mubr.bf16.gmra.mxu0 %v40
    %v99 = vpop.f32.mrf.mxu0
    %v100 = vadd.f32 0.0, %v99
    %v101 = vpop.f32.mrf.mxu0
    %v102 = vpop.f32.mrf.mxu0
    %v103 = vpop.f32.mrf.mxu0
    %104 = vdwg.mxu0
    %s105 = smul.u32 0, 128
    %v106 = vlaneseq
    %v107 = vand.u32 %v106, 127
    %v108 = vstv %s105
    %v109 = vadd.s32 %v108, %v107
    %vm110 = vcmp.lt.s32.totalorder %v109, 16
    %v111 = vsel %vm110, %v100, -inf
    %v112 = vld [vmem:[%s2] sm:$0xff]
    %v113 = vld [vmem:[#allocation4] sm:$0xff]
    %114 = vset.pattern.permute.xlu0 0
    %115 = vperm.xlu0 %114, %v112
    %v116 = vpop.permute.xlu0 %115
    %vm117 = vcmp.eq.s32.totalorder %v109, %v116
    %v118 = vsel %vm117, %v111, 0.0
    %119 = vadd.xlane.f32.xlu0 %v118
    %v120 = vpop.xlane.xlu0 %119
    %v121 = vadd.f32 %v113, %v120
    %vm122 = vcmask 7168
    %123 = vst.msk [vmem:[#allocation4] sm:$0xff] %vm122, %v121
    %v124 = vld [vmem:[#allocation2] sm:$0xff]
    %125 = vmax.xlane.f32.xlu0 %v111
    %v126 = vpop.xlane.xlu0 %125
    %v127 = vmax.f32 %v124, %v126
    %v128 = vsub.f32 %v124, %v127
    %v129 = vmul.f32 %v128, 1.442695
    %v130 = vpow.pop %v129
    %v131 = vld [vmem:[#allocation3] sm:$0xff]
    %v132 = vmul.f32 %v130, %v131
    %134 = vset.pattern.permute.xlu0 0
    %135 = vperm.xlu0 %134, %v127
    %v136 = vpop.permute.xlu0 %135
    %v138 = vsub.f32 %v111, %v136
    %v139 = vmul.f32 %v138, 1.442695
    %v140 = vpow.pop %v139
    %141 = vadd.xlane.f32.xlu0 %v140
    %v142 = vpop.xlane.xlu0 %141
    %v143 = vadd.f32 %v132, %v142
    %144 = vst.msk [vmem:[#allocation3] sm:$0xff] %vm122, %v143
    %145 = vst.msk [vmem:[#allocation2] sm:$0xff] %vm122, %v127
    // Predicated region
    $region22: #{tpu_custom_call.1} parent=1 // pred_check
      %p146 = pneg %p30
    $region23: #{tpu_custom_call.1} parent=1 // pred_check_branch
      %148 = sbr.rel (%p146) target = $region25
    $region24: #{tpu_custom_call.1} parent=1 // pred_region
      %v149 = vld [vmem:[#allocation2] sm:$0xff]
      %v150 = vld [vmem:[#allocation3] sm:$0xff]
      %v151 = vlog2.pop %v150
      %v152 = vmul.f32 %v151, 0.6931472
      %v153 = vadd.f32 %v149, %v152
      %v154 = vld [vmem:[#allocation4] sm:$0xff]
      %v155 = vsub.f32 %v153, %v154
      %s156 = smul.u32 0, 8
      %v157 = vlaneseq
      %v158 = vshrl.u32 %v157, 7
      %v159 = vstv %s156
      %v160 = vadd.s32 %v159, %v158
      %vm161 = vcmp.lt.s32.totalorder %v160, 8
      %v162 = vsel %vm161, %v155, 0.0
      %v163 = vsel %vm122, %v162, 0.0
      %164 = vadd.xlane.f32.xlu0 %v163
      %v165 = vpop.xlane.xlu0 %164
      %v166 = vrot.slane %v165, 4
      %v167 = vadd.f32 %v165, %v166
      %v168 = vrot.slane %v167, 2
      %v169 = vadd.f32 %v167, %v168
      %v170 = vrot.slane %v169, 1
      %v171 = vadd.f32 %v169, %v170
      %s172 = vtos %v171
      %s173 = scalar_lea.smem [#allocation8], 0
      %174 = sst [smem:[%s173]] %s172
    $region25: #{tpu_custom_call.1} parent=1 // pred_fallthru
      _
    // Predicated region
    $region26: #{tpu_custom_call.1} parent=1 // pred_check
      _
    $region27: #{tpu_custom_call.1} parent=1 // pred_check_branch
      %176 = sbr.rel (0) target = $region29
    $region28: #{tpu_custom_call.1} parent=1 // pred_region
      %s178 = ssub.s32 16, 16
      %179 = vsyncadd [#allocation7], %s178
      %182 = dma.smem_to_hbm [#allocation8], 16, %s3, [#allocation7]
    $region29: #{tpu_custom_call.1} parent=1 // pred_fallthru
      _
    // Predicated region
    $region30: #{tpu_custom_call.1} parent=1 // pred_check
      _
    $region31: #{tpu_custom_call.1} parent=1 // pred_check_branch
      %184 = sbr.rel (0) target = $region33
    $region32: #{tpu_custom_call.1} parent=1 // pred_region
      %185 = dma.done [#allocation7], 16
    $region33: #{tpu_custom_call.1} parent=1 // pred_fallthru
      _
    %186 = sfence
    %187 = vsyncpa [#allocation6], 1
    %188 = vsyncpa [#allocation7], 1

</llo_original>
